<compile_context>
chip_gen: v7x
topology: tpu7x:2x2x1
jax: 0.10.0
libtpu: 0.0.40
codegen_flags: <defaults>
</compile_context>

<pallas_src>
import jax
import jax.numpy as jnp
from jax import lax
from jax.experimental import pallas as pl
from jax.experimental.pallas import tpu as pltpu


def _conv_pool_kernel(p_ref, w_ref, pool_ref, o_ref):
    # p_ref   : (K, S)       im2col patches + ones row (bias); lanes = spatial
    # w_ref   : (Cout, K)    conv weights with bias folded in as last column
    # pool_ref: (S, SO)      adaptive-avg-pool matrix (every column sums to 1)
    # o_ref   : (Cout, SO)
    # Conv (+bias) as one MXU matmul, f32 accumulation; lanes carry spatial.
    y = jnp.dot(w_ref[...], p_ref[...], preferred_element_type=jnp.float32)
    # Adaptive average pool as one matmul; result lands directly in output order.
    pooled = jnp.dot(y.astype(pool_ref.dtype), pool_ref[...],
                     preferred_element_type=jnp.float32)
    o_ref[...] = pooled.astype(o_ref.dtype)


def _adaptive_pool_matrix(in_size: int, out_size: int) -> jnp.ndarray:
    """P[o, i] = 1/len(window_o) if i in window_o else 0 (PyTorch AdaptiveAvgPool)."""
    rows = []
    for o in range(out_size):
        start = (o * in_size) // out_size
        end = -(-((o + 1) * in_size) // out_size)  # ceil
        row = [0.0] * in_size
        for i in range(start, end):
            row[i] = 1.0 / (end - start)
        rows.append(row)
    return jnp.asarray(rows, dtype=jnp.float32)


def _conv_pool_call(patches, w_aug, pool, cout):
    """patches: (NB, K, S); w_aug: (Cout, K); pool: (S, SO) -> (NB, Cout, SO)."""
    nb, k, s = patches.shape
    so = pool.shape[1]

    def run(single_buffer_invariants: bool):
        if single_buffer_invariants:
            inv = lambda shape, imap: pl.BlockSpec(
                shape, imap, pipeline_mode=pl.Buffered(1))
        else:
            inv = pl.BlockSpec
        return pl.pallas_call(
            _conv_pool_kernel,
            out_shape=jax.ShapeDtypeStruct((nb, cout, so), jnp.float32),
            grid_spec=pltpu.PrefetchScalarGridSpec(
                num_scalar_prefetch=0,
                grid=(nb,),
                in_specs=[
                    pl.BlockSpec((None, k, s), lambda n: (n, 0, 0)),
                    inv((cout, k), lambda n: (0, 0)),
                    inv((s, so), lambda n: (0, 0)),
                ],
                out_specs=pl.BlockSpec((None, cout, so), lambda n: (n, 0, 0)),
            ),
            compiler_params=pltpu.CompilerParams(
                dimension_semantics=("parallel",),
            ),
        )(patches, w_aug, pool)

    try:
        return run(True)
    except Exception:
        # pl.Buffered(1) not supported on this jax version/backend: fall back
        # to default double-buffering of the grid-invariant operands.
        return run(False)


def bottleneck_conv_ave_pool(x_nchw, weight, bias, out_spatial, *,
                             compute_dtype=jnp.bfloat16,
                             collapse_batch=False):
    """x_nchw: (N, Cin, H, W); weight: (Cout, Cin, 3, 3); bias: (Cout,).

    compute_dtype: dtype of the matmul operands (bf16 recommended on v6e/v7x;
        accumulation is always f32).
    collapse_batch: fold batch onto the lane axis -> single grid step
        (recommended on v5e/v6e at tiny N; default keeps one "parallel" step
        per batch element so both v7x TensorCores get work).
    """
    N, Cin, H, W = x_nchw.shape
    Cout = weight.shape[0]
    if isinstance(out_spatial, int):
        Oh = Ow = out_spatial
    else:
        Oh, Ow = out_spatial
    K = 9 * Cin + 1  # +1: ones row carrying the bias

    # ---- XLA-side glue (layout plumbing, not compute hoisting) ----
    # im2col in C-major layout: patches[n, (kh*3+kw)*Cin + cin, h*W + w]
    #   = x_padded[n, cin, h+kh, w+kw]; last row is all ones (bias).
    xp = jnp.pad(x_nchw.astype(jnp.float32), ((0, 0), (0, 0), (1, 1), (1, 1)))
    taps = [xp[:, :, kh:kh + H, kw:kw + W] for kh in range(3) for kw in range(3)]
    patches = jnp.stack(taps, axis=1).reshape(N, 9 * Cin, H * W)
    ones = jnp.ones((N, 1, H * W), dtype=patches.dtype)
    patches = jnp.concatenate([patches, ones], axis=1).astype(compute_dtype)

    # Weights reordered to match the patch row order, bias as the last column.
    w2 = jnp.transpose(weight, (0, 2, 3, 1)).reshape(Cout, 9 * Cin)
    w_aug = jnp.concatenate(
        [w2, bias.reshape(Cout, 1)], axis=1).astype(compute_dtype)       # (Cout, K)

    # Combined pooling matrix: pool[h*W+w, oh*Ow+ow] = ph[oh,h] * pw[ow,w].
    # Every column sums to 1 (required for the bias-through-pool fold above).
    ph = _adaptive_pool_matrix(H, Oh)                                    # (Oh, H)
    pw = _adaptive_pool_matrix(W, Ow)                                    # (Ow, W)
    pool = (ph.T[:, None, :, None] * pw.T[None, :, None, :]).reshape(H * W, Oh * Ow)

    if collapse_batch:
        # One grid step: lanes carry (n, h, w); pool becomes block-diagonal.
        patches1 = jnp.transpose(patches, (1, 0, 2)).reshape(1, K, N * H * W)
        pool_nd = jnp.kron(jnp.eye(N, dtype=pool.dtype), pool)          # (N*H*W, N*Oh*Ow)
        out = _conv_pool_call(patches1, w_aug, pool_nd.astype(compute_dtype), Cout)
        return out.reshape(Cout, N, Oh, Ow).transpose(1, 0, 2, 3)

    out = _conv_pool_call(patches, w_aug, pool.astype(compute_dtype), Cout)
    return out.reshape(N, Cout, Oh, Ow)


def _reference(x_nchw, weight, bias, out_spatial):
    """Pure-JAX reference: lax conv + exact adaptive avg pool (validation)."""
    if isinstance(out_spatial, int):
        Oh = Ow = out_spatial
    else:
        Oh, Ow = out_spatial
    y = lax.conv_general_dilated(
        x_nchw.astype(jnp.float32), weight.astype(jnp.float32),
        window_strides=(1, 1), padding=((1, 1), (1, 1)),
        dimension_numbers=("NCHW", "OIHW", "NCHW"),
    ) + bias.reshape(1, -1, 1, 1)
    H, W = y.shape[2], y.shape[3]
    ph = _adaptive_pool_matrix(H, Oh)  # (Oh, H)
    pw = _adaptive_pool_matrix(W, Ow)  # (Ow, W)
    return jnp.einsum("ph,nchw,qw->ncpq", ph, y, pw)


if __name__ == "__main__":
    # batch=2, in_channels=4, out_channels=8, spatial=16x16, out_spatial=5
    # (non-divisible -> exercises the adaptive-pool window logic).
    N, Cin, Cout, H, W = 2, 4, 8, 16, 16
    OUT_SPATIAL = 5

    key = jax.random.PRNGKey(0)
    kx, kw, kb = jax.random.split(key, 3)
    x = jax.random.normal(kx, (N, Cin, H, W), dtype=jnp.float32)
    weight = jax.random.normal(kw, (Cout, Cin, 3, 3), dtype=jnp.float32) * 0.1
    bias = jax.random.normal(kb, (Cout,), dtype=jnp.float32) * 0.01

    ref = jax.block_until_ready(_reference(x, weight, bias, OUT_SPATIAL))

    # 1) f32 operands, per-batch "parallel" grid (tight numerical check).
    out_f32 = jax.block_until_ready(
        bottleneck_conv_ave_pool(x, weight, bias, OUT_SPATIAL,
                                 compute_dtype=jnp.float32,
                                 collapse_batch=False))
    assert out_f32.shape == (N, Cout, OUT_SPATIAL, OUT_SPATIAL), out_f32.shape
    err32 = float(jnp.max(jnp.abs(out_f32 - ref)))
    assert jnp.allclose(out_f32, ref, atol=1e-4, rtol=1e-4), err32

    # 2) Default perf config: bf16 operands + collapsed batch grid.  The looser
    #    tolerance is expected bf16 precision loss, not a kernel error.
    out_bf16 = jax.block_until_ready(
        bottleneck_conv_ave_pool(x, weight, bias, OUT_SPATIAL,
                                 collapse_batch=True))
    assert out_bf16.shape == (N, Cout, OUT_SPATIAL, OUT_SPATIAL), out_bf16.shape
    err16 = float(jnp.max(jnp.abs(out_bf16 - ref)))
    assert jnp.allclose(out_bf16, ref, atol=8e-2, rtol=5e-2), err16

    print("KERNEL_OK")
</pallas_src>

<mosaic_0001>
module attributes {stable_mosaic.version = 11 : i64} {
  func.func @_conv_pool_kernel(%arg0: i32, %arg1: memref<1x37x256xf32, #tpu.memory_space<vmem>>, %arg2: memref<8x37xf32, #tpu.memory_space<vmem>>, %arg3: memref<256x25xf32, #tpu.memory_space<vmem>>, %arg4: memref<1x8x25xf32, #tpu.memory_space<vmem>>) attributes {dimension_semantics = [#tpu.dimension_semantics<parallel>], iteration_bounds = array<i64: 2>, scalar_prefetch = 0 : i64, scratch_operands = 0 : i64, tpu.core_type = #tpu.core_type<tc>, window_params = [{transform_indices = @transform_0, window_bounds = array<i64: 1, 37, 256>}, {pipeline_mode = #tpu.pipeline_mode<synchronous>, transform_indices = @transform_1, window_bounds = array<i64: 8, 37>}, {pipeline_mode = #tpu.pipeline_mode<synchronous>, transform_indices = @transform_2, window_bounds = array<i64: 256, 25>}, {transform_indices = @transform_3, window_bounds = array<i64: 1, 8, 25>}]} {
    %c0 = arith.constant 0 : index
    %c0_0 = arith.constant 0 : index
    %0 = vector.load %arg2[%c0, %c0_0] : memref<8x37xf32, #tpu.memory_space<vmem>>, vector<8x37xf32>
    %c0_1 = arith.constant 0 : index
    %c0_2 = arith.constant 0 : index
    %c0_3 = arith.constant 0 : index
    %1 = vector.load %arg1[%c0_1, %c0_2, %c0_3] : memref<1x37x256xf32, #tpu.memory_space<vmem>>, vector<1x37x256xf32>
    %2 = vector.shape_cast %1 : vector<1x37x256xf32> to vector<37x256xf32>
    %cst = arith.constant dense<0.000000e+00> : vector<8x256xf32>
    %3 = tpu.matmul %0, %2, %cst {dimension_numbers = #tpu.dot_dimension_numbers<[1], [0], [0], [1], [0, 0, 1, 1], [], []>} : vector<8x37xf32>, vector<37x256xf32>, vector<8x256xf32> -> vector<8x256xf32>
    %c0_4 = arith.constant 0 : index
    %c0_5 = arith.constant 0 : index
    %4 = vector.load %arg3[%c0_4, %c0_5] : memref<256x25xf32, #tpu.memory_space<vmem>>, vector<256x25xf32>
    %cst_6 = arith.constant dense<0.000000e+00> : vector<8x25xf32>
    %5 = tpu.matmul %3, %4, %cst_6 {dimension_numbers = #tpu.dot_dimension_numbers<[1], [0], [0], [1], [0, 0, 1, 1], [], []>} : vector<8x256xf32>, vector<256x25xf32>, vector<8x25xf32> -> vector<8x25xf32>
    %c0_7 = arith.constant 0 : index
    %c0_8 = arith.constant 0 : index
    %c0_9 = arith.constant 0 : index
    %6 = vector.load %arg4[%c0_7, %c0_8, %c0_9] : memref<1x8x25xf32, #tpu.memory_space<vmem>>, vector<1x8x25xf32>
    %7 = vector.shape_cast %6 : vector<1x8x25xf32> to vector<8x25xf32>
    %8 = vector.shape_cast %5 : vector<8x25xf32> to vector<1x8x25xf32>
    tpu.vector_store %arg4[%c0_7, %c0_8, %c0_9], %8 {strides = array<i32>} : memref<1x8x25xf32, #tpu.memory_space<vmem>>, vector<1x8x25xf32>,
    return
  }
  func.func @transform_0(%arg0: i32) -> (i32, i32, i32) {
    %c0_i32 = arith.constant 0 : i32
    %c0_i32_0 = arith.constant 0 : i32
    %c0_i32_1 = arith.constant 0 : i32
    return %arg0, %c0_i32, %c0_i32_0 : i32, i32, i32
  }
  func.func @transform_1(%arg0: i32) -> (i32, i32) {
    %c0_i32 = arith.constant 0 : i32
    %c0_i32_0 = arith.constant 0 : i32
    %c0_i32_1 = arith.constant 0 : i32
    return %c0_i32, %c0_i32_0 : i32, i32
  }
  func.func @transform_2(%arg0: i32) -> (i32, i32) {
    %c0_i32 = arith.constant 0 : i32
    %c0_i32_0 = arith.constant 0 : i32
    %c0_i32_1 = arith.constant 0 : i32
    return %c0_i32, %c0_i32_0 : i32, i32
  }
  func.func @transform_3(%arg0: i32) -> (i32, i32, i32) {
    %c0_i32 = arith.constant 0 : i32
    %c0_i32_0 = arith.constant 0 : i32
    %c0_i32_1 = arith.constant 0 : i32
    return %arg0, %c0_i32, %c0_i32_0 : i32, i32, i32
  }
}

module attributes {stable_mosaic.version = 11 : i64} {
  func.func @_conv_pool_kernel(%arg0: i32, %arg1: memref<1x37x256xf32, #tpu.memory_space<vmem>>, %arg2: memref<8x37xf32, #tpu.memory_space<vmem>>, %arg3: memref<256x25xf32, #tpu.memory_space<vmem>>, %arg4: memref<1x8x25xf32, #tpu.memory_space<vmem>>) attributes {dimension_semantics = [#tpu.dimension_semantics<parallel>], iteration_bounds = array<i64: 2>, scalar_prefetch = 0 : i64, scratch_operands = 0 : i64, tpu.core_type = #tpu.core_type<tc>, window_params = [{transform_indices = @transform_0, window_bounds = array<i64: 1, 37, 256>}, {pipeline_mode = #tpu.pipeline_mode<synchronous>, transform_indices = @transform_1, window_bounds = array<i64: 8, 37>}, {pipeline_mode = #tpu.pipeline_mode<synchronous>, transform_indices = @transform_2, window_bounds = array<i64: 256, 25>}, {transform_indices = @transform_3, window_bounds = array<i64: 1, 8, 25>}]} {
    %c0 = arith.constant 0 : index
    %c0_0 = arith.constant 0 : index
    %0 = vector.load %arg2[%c0, %c0_0] : memref<8x37xf32, #tpu.memory_space<vmem>>, vector<8x37xf32>
    %c0_1 = arith.constant 0 : index
    %c0_2 = arith.constant 0 : index
    %c0_3 = arith.constant 0 : index
    %1 = vector.load %arg1[%c0_1, %c0_2, %c0_3] : memref<1x37x256xf32, #tpu.memory_space<vmem>>, vector<1x37x256xf32>
    %2 = vector.shape_cast %1 : vector<1x37x256xf32> to vector<37x256xf32>
    %cst = arith.constant dense<0.000000e+00> : vector<8x256xf32>
    %3 = tpu.matmul %0, %2, %cst {dimension_numbers = #tpu.dot_dimension_numbers<[1], [0], [0], [1], [0, 0, 1, 1], [], []>} : vector<8x37xf32>, vector<37x256xf32>, vector<8x256xf32> -> vector<8x256xf32>
    %c0_4 = arith.constant 0 : index
    %c0_5 = arith.constant 0 : index
    %4 = vector.load %arg3[%c0_4, %c0_5] : memref<256x25xf32, #tpu.memory_space<vmem>>, vector<256x25xf32>
    %cst_6 = arith.constant dense<0.000000e+00> : vector<8x25xf32>
    %5 = tpu.matmul %3, %4, %cst_6 {dimension_numbers = #tpu.dot_dimension_numbers<[1], [0], [0], [1], [0, 0, 1, 1], [], []>} : vector<8x256xf32>, vector<256x25xf32>, vector<8x25xf32> -> vector<8x25xf32>
    %c0_7 = arith.constant 0 : index
    %c0_8 = arith.constant 0 : index
    %c0_9 = arith.constant 0 : index
    %6 = vector.load %arg4[%c0_7, %c0_8, %c0_9] : memref<1x8x25xf32, #tpu.memory_space<vmem>>, vector<1x8x25xf32>
    %7 = vector.shape_cast %6 : vector<1x8x25xf32> to vector<8x25xf32>
    %8 = vector.shape_cast %5 : vector<8x25xf32> to vector<1x8x25xf32>
    tpu.vector_store %arg4[%c0_7, %c0_8, %c0_9], %8 {strides = array<i32>} : memref<1x8x25xf32, #tpu.memory_space<vmem>>, vector<1x8x25xf32>,
    return
  }
  func.func @transform_0(%arg0: i32) -> (i32, i32, i32) {
    %c0_i32 = arith.constant 0 : i32
    %c0_i32_0 = arith.constant 0 : i32
    %c0_i32_1 = arith.constant 0 : i32
    return %arg0, %c0_i32, %c0_i32_0 : i32, i32, i32
  }
  func.func @transform_1(%arg0: i32) -> (i32, i32) {
    %c0_i32 = arith.constant 0 : i32
    %c0_i32_0 = arith.constant 0 : i32
    %c0_i32_1 = arith.constant 0 : i32
    return %c0_i32, %c0_i32_0 : i32, i32
  }
  func.func @transform_2(%arg0: i32) -> (i32, i32) {
    %c0_i32 = arith.constant 0 : i32
    %c0_i32_0 = arith.constant 0 : i32
    %c0_i32_1 = arith.constant 0 : i32
    return %c0_i32, %c0_i32_0 : i32, i32
  }
  func.func @transform_3(%arg0: i32) -> (i32, i32, i32) {
    %c0_i32 = arith.constant 0 : i32
    %c0_i32_0 = arith.constant 0 : i32
    %c0_i32_1 = arith.constant 0 : i32
    return %arg0, %c0_i32, %c0_i32_0 : i32, i32, i32
  }
}

</mosaic_0001>

<llo_original>
// kernel: tpu_custom_call.1
$region0: #{tpu_custom_call.1}
  #allocation0 [shape = 'u32[]', space=smem, size = 0x4, offset = 0x4, fixed_abs, tag = 'smem constant byte address 0x4 - core index']
  #allocation1 [shape = 'u32[144,128]{1,0:T(1,128)}', space=vmem, size = 0x12000, scoped, tag = 'internal scratch']
  %s0 = inlined_call_operand.vmem [shape: f32[2,37,256], index: 0, kind: input, shape index: {}]
  %s1 = inlined_call_operand.vmem [shape: f32[8,37], index: 1, kind: input, shape index: {}]
  %s2 = inlined_call_operand.vmem [shape: f32[256,25], index: 2, kind: input, shape index: {}]
  %s3 = inlined_call_operand.hbm [shape: f32[2,8,25], index: 3, kind: output, shape index: {}]
  %s4 = sld [smem:[#allocation0]]
  $region45: #{tpu_custom_call.1} parent=0
    _
  %s6 = ssub.s32 1, %s4
  %s7 = scalar_select 0, %s6, %s4
  $region1: #{tpu_custom_call.1} parent=0
    #allocation2 [shape = 'u8[8192]{0}', space=vmem, size = 0x2000, scoped, tag = 'output window, operand 0']
    #allocation3 [shape = 's32[2]{0}', space=sflag, size = 0x8, scoped, tag = 'scoped memory for tpu_custom_call.1']
    %8 = vsyncpa [#allocation3], 0
    %s9 = scalar_lea.sflag [#allocation3], 1
    %10 = vsyncpa %s9, 0
    loop: start=0, step=1, limit=4
    $region2: #{tpu_custom_call.1} parent=1 // loop_pre_header
      _
    $region3: #{tpu_custom_call.1} parent=1 // loop_header
      %s12 = sphi 0, %s16
      %p13 = scmp.ge.s32.totalorder %s12, 4
      %s22 = sphi 0, %s24
      %s25 = sphi 0, %s22
      %s26 = sphi 0, %s25
      %s42 = sphi 0, %s26
      %s46 = sphi 0, %s46
      %s48 = sphi 0, %s46
      %s49 = sphi 0, %s48
      %s63 = sphi 0, %s49
      %s67 = sphi 0, %s67
      %s69 = sphi 0, %s67
      %s70 = sphi 0, %s69
      %s84 = sphi 0, %s70
      %s90 = sphi 0, %s92
      %s93 = sphi 0, %s90
      %s94 = sphi 0, %s93
      %s110 = sphi 0, %s94
    $region4: #{tpu_custom_call.1} parent=1 // loop_header_branch
      %15 = sbr.rel (%p13) target = $region8
    $region5: #{tpu_custom_call.1} parent=1 // loop_body
      %s17 = ssub.s32 %s12, 1
      %s18 = ssub.s32 %s12, 2
      %s19 = sadd.s32 %s12, 1
      %s20 = ssub.s32 %s12, %s19
      %p21 = scmp.eq.s32.totalorder %s20, 0
      %s23 = sadd.s32 %s22, 1
      %s24 = scalar_select %p21, %s22, %s23
      %p27 = pneg %p21
      %p28 = scmp.eq.s32.totalorder %s12, 1
      %p29 = por %p27, %p28
      %p30 = scmp.ne.s32.totalorder %s22, %s25
      %p31 = scmp.eq.s32.totalorder %s12, 0
      %p32 = por %p30, %p31
      %p33 = scmp.ne.s32.totalorder %s22, %s25
      %p34 = scmp.eq.s32.totalorder %s17, 1
      %p35 = por %p33, %p34
      %p36 = scmp.ne.s32.totalorder %s25, %s26
      %p37 = scmp.eq.s32.totalorder %s17, 0
      %p38 = por %p36, %p37
      %p39 = scmp.ne.s32.totalorder %s25, %s26
      %p40 = scmp.eq.s32.totalorder %s18, 1
      %p41 = por %p39, %p40
      %p43 = scmp.ne.s32.totalorder %s26, %s42
      %p44 = scmp.eq.s32.totalorder %s18, 0
      %p45 = por %p43, %p44
      %s47 = sadd.s32 %s46, 1
      %p50 = scmp.eq.s32.totalorder %s12, 1
      %p51 = scmp.ne.s32.totalorder %s46, %s48
      %p52 = scmp.eq.s32.totalorder %s12, 0
      %p53 = por %p51, %p52
      %p54 = scmp.ne.s32.totalorder %s46, %s48
      %p55 = scmp.eq.s32.totalorder %s17, 1
      %p56 = por %p54, %p55
      %p57 = scmp.ne.s32.totalorder %s48, %s49
      %p58 = scmp.eq.s32.totalorder %s17, 0
      %p59 = por %p57, %p58
      %p60 = scmp.ne.s32.totalorder %s48, %s49
      %p61 = scmp.eq.s32.totalorder %s18, 1
      %p62 = por %p60, %p61
      %p64 = scmp.ne.s32.totalorder %s49, %s63
      %p65 = scmp.eq.s32.totalorder %s18, 0
      %p66 = por %p64, %p65
      %s68 = sadd.s32 %s67, 1
      %p71 = scmp.eq.s32.totalorder %s12, 1
      %p72 = scmp.ne.s32.totalorder %s67, %s69
      %p73 = scmp.eq.s32.totalorder %s12, 0
      %p74 = por %p72, %p73
      %p75 = scmp.ne.s32.totalorder %s67, %s69
      %p76 = scmp.eq.s32.totalorder %s17, 1
      %p77 = por %p75, %p76
      %p78 = scmp.ne.s32.totalorder %s69, %s70
      %p79 = scmp.eq.s32.totalorder %s17, 0
      %p80 = por %p78, %p79
      %p81 = scmp.ne.s32.totalorder %s69, %s70
      %p82 = scmp.eq.s32.totalorder %s18, 1
      %p83 = por %p81, %p82
      %p85 = scmp.ne.s32.totalorder %s70, %s84
      %p86 = scmp.eq.s32.totalorder %s18, 0
      %p87 = por %p85, %p86
      %s88 = ssub.s32 %s12, %s19
      %p89 = scmp.eq.s32.totalorder %s88, 0
      %s91 = sadd.s32 %s90, 1
      %s92 = scalar_select %p89, %s90, %s91
      %p95 = pneg %p89
      %p96 = scmp.eq.s32.totalorder %s12, 1
      %p97 = por %p95, %p96
      %p98 = scmp.ne.s32.totalorder %s90, %s93
      %p99 = scmp.eq.s32.totalorder %s12, 0
      %p100 = por %p98, %p99
      %p101 = scmp.ne.s32.totalorder %s90, %s93
      %p102 = scmp.eq.s32.totalorder %s17, 1
      %p103 = por %p101, %p102
      %p104 = scmp.ne.s32.totalorder %s93, %s94
      %p105 = scmp.eq.s32.totalorder %s17, 0
      %p106 = por %p104, %p105
      %p107 = scmp.ne.s32.totalorder %s93, %s94
      %p108 = scmp.eq.s32.totalorder %s18, 1
      %p109 = por %p107, %p108
      %p111 = scmp.ne.s32.totalorder %s94, %s110
      %p112 = scmp.eq.s32.totalorder %s18, 0
      %p113 = por %p111, %p112
      %p114 = scmp.le.s32.totalorder 1, %s12
      %p115 = scmp.lt.s32.totalorder %s12, 3
      %p116 = pnand %p114, %p115
      %p117 = pneg %p116
      // Predicated region
      $region9: #{tpu_custom_call.1} parent=5 // pred_check
        _
      $region10: #{tpu_custom_call.1} parent=5 // pred_check_branch
        %119 = sbr.rel (%p116) target = $region12
      $region11: #{tpu_custom_call.1} parent=5 // pred_region
        %s120 = ssub.s32 %s12, 1
        // Predicated region
        $region13: #{tpu_custom_call.1} parent=11 // pred_check
          %p121 = pneg %p59
        $region14: #{tpu_custom_call.1} parent=11 // pred_check_branch
          %123 = sbr.rel (%p121) target = $region16
        $region15: #{tpu_custom_call.1} parent=11 // pred_region
          _
        $region16: #{tpu_custom_call.1} parent=11 // pred_fallthru
          _
        // Predicated region
        $region17: #{tpu_custom_call.1} parent=11 // pred_check
          %p124 = pneg %p80
        $region18: #{tpu_custom_call.1} parent=11 // pred_check_branch
          %126 = sbr.rel (%p124) target = $region20
        $region19: #{tpu_custom_call.1} parent=11 // pred_region
          _
        $region20: #{tpu_custom_call.1} parent=11 // pred_fallthru
          _
      $region12: #{tpu_custom_call.1} parent=5 // pred_fallthru
        _
      %p127 = scmp.lt.s32.totalorder %s12, 2
      // Predicated region
      $region21: #{tpu_custom_call.1} parent=5 // pred_check
        %p128 = pneg %p127
      $region22: #{tpu_custom_call.1} parent=5 // pred_check_branch
        %130 = sbr.rel (%p128) target = $region24
      $region23: #{tpu_custom_call.1} parent=5 // pred_region
        // Predicated region
        $region25: #{tpu_custom_call.1} parent=23 // pred_check
          %p131 = pneg %p32
        $region26: #{tpu_custom_call.1} parent=23 // pred_check_branch
          %133 = sbr.rel (%p131) target = $region28
        $region27: #{tpu_custom_call.1} parent=23 // pred_region
          %p134 = scmp.lt.s32.totalorder %s12, 1
          %s135 = scalar_select %p134, %s12, 1
          %s136 = smul.addr %s135, 10
          %s137 = smul.addr %s136, 8
          %s138 = scalar_lea.vmem %s0, %s137
        $region28: #{tpu_custom_call.1} parent=23 // pred_fallthru
          _
      $region24: #{tpu_custom_call.1} parent=5 // pred_fallthru
        _
      %p139 = scmp.le.s32.totalorder 1, %s12
      %p140 = scmp.lt.s32.totalorder %s12, 3
      %p141 = pnand %p139, %p140
      %p142 = pneg %p141
      // Predicated region
      $region29: #{tpu_custom_call.1} parent=5 // pred_check
        _
      $region30: #{tpu_custom_call.1} parent=5 // pred_check_branch
        %144 = sbr.rel (%p141) target = $region32
      $region31: #{tpu_custom_call.1} parent=5 // pred_region
        %s145 = ssub.s32 %s12, 1
        %p146 = scmp.lt.s32.totalorder %s17, 1
        %s147 = scalar_select %p146, %s17, 1
        %s148 = smul.addr %s147, 10
        %s149 = smul.addr %s148, 8
        %s150 = scalar_lea.vmem %s0, %s149
        %p151 = pneg %p38
        %p152 = pneg %p35
        %p153 = pneg %p59
        %p154 = pneg %p56
        %p155 = pneg %p80
        %p156 = pneg %p77
        %p157 = pneg %p106
        %p158 = pneg %p103
        %s159 = sand.u32 %s93, 1
        %s160 = scalar_lea.sflag [#allocation3], %s159
        %s161 = sand.u32 %s93, 1
        %s162 = smul.addr %s161, 8
        %s163 = scalar_lea.vmem [#allocation2], %s162
        %p164 = scmp.lt.s32.totalorder %s17, 1
        %s165 = scalar_select %p164, %s17, 1
        %s166 = smul.addr %s165, 10
        %s167 = smul.addr %s166, 8
        %s168 = scalar_lea.vmem %s0, %s167
        %v169 = vld [vmem:[%s1] sm:$0xff]
        %v170 = vld [vmem:[%s168] sm:$0xff]
        %v171 = vld [vmem:[%s168 + $0x8] sm:$0xff]
        %v172 = vld [vmem:[%s168 + $0x10] sm:$0xff]
        %v173 = vld [vmem:[%s168 + $0x18] sm:$0xff]
        %v174 = vld [vmem:[%s168 + $0x20] sm:$0xff]
        %v175 = vld [vmem:[%s168 + $0x28] sm:$0xff]
        %v176 = vld [vmem:[%s168 + $0x30] sm:$0xff]
        %v177 = vld [vmem:[%s168 + $0x38] sm:$0xff]
        %v178 = vld [vmem:[%s168 + $0x40] sm:$0x1f]
        %v179 = vld [vmem:[%s168 + $0x48] sm:$0x1f]
        %vm180 = vcmask 302080
        %v182 = vsel %vm180, %v169, 0
        %vm184 = vcmask 1044480
        %v186 = vsel %vm184, %v178, 0
        %v189 = vsel %vm184, %v179, 0
        %191 = vmatprep.subr.mxu0 %v171
        %192 = vmatpush1.msra.mxu0 %v170
        %193 = vmatprep.subr.mxu0 %v173
        %194 = vmatpush1.msra.mxu0 %v172
        %195 = vmatprep.subr.mxu0 %v175
        %196 = vmatpush1.msra.mxu0 %v174
        %197 = vmatprep.subr.mxu0 %v177
        %198 = vmatpush1.msra.mxu0 %v176
        %199 = vmatprep.subr.mxu0 %v189
        %200 = vmatpush1.msra.mxu0 %v186
        %201 = vmatprep.subr.mxu0 0.0
        %202 = vmatpush1.msra.mxu0 0.0
        %203 = vmatprep.subr.mxu0 0.0
        %204 = vmatpush1.msra.mxu0 0.0
        %205 = vmatprep.subr.mxu0 0.0
        %206 = vmatpush1.msra.mxu0 0.0
        %207 = vmatprep.subr.mxu0 0.0
        %208 = vmatpush1.msra.mxu0 0.0
        %209 = vmatprep.subr.mxu0 0.0
        %210 = vmatpush1.msra.mxu0 0.0
        %211 = vmatprep.subr.mxu0 0.0
        %212 = vmatpush1.msra.mxu0 0.0
        %213 = vmatprep.subr.mxu0 0.0
        %214 = vmatpush1.msra.mxu0 0.0
        %215 = vmatprep.subr.mxu0 0.0
        %216 = vmatpush1.msra.mxu0 0.0
        %217 = vmatprep.subr.mxu0 0.0
        %218 = vmatpush1.msra.mxu0 0.0
        %219 = vmatprep.subr.mxu0 0.0
        %220 = vmatpush1.msra.mxu0 0.0
        %221 = vmatprep.subr.mxu0 0.0
        %222 = vmatpush1.msra.mxu0 0.0
        %223 = vmatprep.subr.mxu0 0.0
        %224 = vmatpush1.msra.mxu0 0.0
        %225 = vmatprep.subr.mxu0 0.0
        %226 = vmatpush1.msra.mxu0 0.0
        %227 = vmatprep.subr.mxu0 0.0
        %228 = vmatpush1.msra.mxu0 0.0
        %229 = vmatprep.subr.mxu0 0.0
        %230 = vmatpush1.msra.mxu0 0.0
        %231 = vmatprep.subr.mxu0 0.0
        %232 = vmatpush1.msra.mxu0 0.0
        %233 = vmatprep.subr.mxu0 0.0
        %234 = vmatpush1.msra.mxu0 0.0
        %235 = vmatprep.subr.mxu0 0.0
        %236 = vmatpush1.msra.mxu0 0.0
        %237 = vmatprep.subr.mxu0 0.0
        %238 = vmatpush1.msra.mxu0 0.0
        %239 = vmatprep.subr.mxu0 0.0
        %240 = vmatpush1.msra.mxu0 0.0
        %241 = vmatprep.subr.mxu0 0.0
        %242 = vmatpush1.msra.mxu0 0.0
        %243 = vmatprep.subr.mxu0 0.0
        %244 = vmatpush1.msra.mxu0 0.0
        %245 = vmatprep.subr.mxu0 0.0
        %246 = vmatpush1.msra.mxu0 0.0
        %247 = vmatprep.subr.mxu0 0.0
        %248 = vmatpush1.msra.mxu0 0.0
        %249 = vmatprep.subr.mxu0 0.0
        %250 = vmatpush1.msra.mxu0 0.0
        %251 = vmatprep.subr.mxu0 0.0
        %252 = vmatpush1.msra.mxu0 0.0
        %253 = vmatprep.subr.mxu0 0.0
        %254 = vmatpush1.msra.mxu0 0.0
        %255 = vmatprep.mubr.f32.mxu0 0.0
        %256 = vmatmul.mubr.f32.gmra.mrb[0].mxu0 %v182
        %v257 = vpop.f32.mrb[0].mxu0
        %v258 = vadd.f32 0.0, %v257
        %v259 = vpop.f32.mrb[0].mxu0
        %v260 = vadd.f32 0.0, %v259
        %261 = vdwg.mxu0
        %v262 = vld [vmem:[%s2] sm:$0xff]
        %v263 = vld [vmem:[%s2 + $0x8] sm:$0xff]
        %v264 = vld [vmem:[%s2 + $0x10] sm:$0xff]
        %v265 = vld [vmem:[%s2 + $0x18] sm:$0xff]
        %v266 = vld [vmem:[%s2 + $0x20] sm:$0xff]
        %v267 = vld [vmem:[%s2 + $0x28] sm:$0xff]
        %v268 = vld [vmem:[%s2 + $0x30] sm:$0xff]
        %v269 = vld [vmem:[%s2 + $0x38] sm:$0xff]
        %v270 = vld [vmem:[%s2 + $0x40] sm:$0xff]
        %v271 = vld [vmem:[%s2 + $0x48] sm:$0xff]
        %v272 = vld [vmem:[%s2 + $0x50] sm:$0xff]
        %v273 = vld [vmem:[%s2 + $0x58] sm:$0xff]
        %v274 = vld [vmem:[%s2 + $0x60] sm:$0xff]
        %v275 = vld [vmem:[%s2 + $0x68] sm:$0xff]
        %v276 = vld [vmem:[%s2 + $0x70] sm:$0xff]
        %v277 = vld [vmem:[%s2 + $0x78] sm:$0xff]
        %v278 = vld [vmem:[%s2 + $0x80] sm:$0xff]
        %v279 = vld [vmem:[%s2 + $0x88] sm:$0xff]
        %v280 = vld [vmem:[%s2 + $0x90] sm:$0xff]
        %v281 = vld [vmem:[%s2 + $0x98] sm:$0xff]
        %v282 = vld [vmem:[%s2 + $0xa0] sm:$0xff]
        %v283 = vld [vmem:[%s2 + $0xa8] sm:$0xff]
        %v284 = vld [vmem:[%s2 + $0xb0] sm:$0xff]
        %v285 = vld [vmem:[%s2 + $0xb8] sm:$0xff]
        %v286 = vld [vmem:[%s2 + $0xc0] sm:$0xff]
        %v287 = vld [vmem:[%s2 + $0xc8] sm:$0xff]
        %v288 = vld [vmem:[%s2 + $0xd0] sm:$0xff]
        %v289 = vld [vmem:[%s2 + $0xd8] sm:$0xff]
        %v290 = vld [vmem:[%s2 + $0xe0] sm:$0xff]
        %v291 = vld [vmem:[%s2 + $0xe8] sm:$0xff]
        %v292 = vld [vmem:[%s2 + $0xf0] sm:$0xff]
        %v293 = vld [vmem:[%s2 + $0xf8] sm:$0xff]
        %294 = vmatprep.subr.mxu0 0.0
        %295 = vmatpush1.msra.mxu0 %v262
        %296 = vmatprep.subr.mxu0 0.0
        %297 = vmatpush1.msra.mxu0 %v263
        %298 = vmatprep.subr.mxu0 0.0
        %299 = vmatpush1.msra.mxu0 %v264
        %300 = vmatprep.subr.mxu0 0.0
        %301 = vmatpush1.msra.mxu0 %v265
        %302 = vmatprep.subr.mxu0 0.0
        %303 = vmatpush1.msra.mxu0 %v266
        %304 = vmatprep.subr.mxu0 0.0
        %305 = vmatpush1.msra.mxu0 %v267
        %306 = vmatprep.subr.mxu0 0.0
        %307 = vmatpush1.msra.mxu0 %v268
        %308 = vmatprep.subr.mxu0 0.0
        %309 = vmatpush1.msra.mxu0 %v269
        %310 = vmatprep.subr.mxu0 0.0
        %311 = vmatpush1.msra.mxu0 %v270
        %312 = vmatprep.subr.mxu0 0.0
        %313 = vmatpush1.msra.mxu0 %v271
        %314 = vmatprep.subr.mxu0 0.0
        %315 = vmatpush1.msra.mxu0 %v272
        %316 = vmatprep.subr.mxu0 0.0
        %317 = vmatpush1.msra.mxu0 %v273
        %318 = vmatprep.subr.mxu0 0.0
        %319 = vmatpush1.msra.mxu0 %v274
        %320 = vmatprep.subr.mxu0 0.0
        %321 = vmatpush1.msra.mxu0 %v275
        %322 = vmatprep.subr.mxu0 0.0
        %323 = vmatpush1.msra.mxu0 %v276
        %324 = vmatprep.subr.mxu0 0.0
        %325 = vmatpush1.msra.mxu0 %v277
        %326 = vmatprep.subr.mxu0 0.0
        %327 = vmatpush1.msra.mxu0 %v278
        %328 = vmatprep.subr.mxu0 0.0
        %329 = vmatpush1.msra.mxu0 %v279
        %330 = vmatprep.subr.mxu0 0.0
        %331 = vmatpush1.msra.mxu0 %v280
        %332 = vmatprep.subr.mxu0 0.0
        %333 = vmatpush1.msra.mxu0 %v281
        %334 = vmatprep.subr.mxu0 0.0
        %335 = vmatpush1.msra.mxu0 %v282
        %336 = vmatprep.subr.mxu0 0.0
        %337 = vmatpush1.msra.mxu0 %v283
        %338 = vmatprep.subr.mxu0 0.0
        %339 = vmatpush1.msra.mxu0 %v284
        %340 = vmatprep.subr.mxu0 0.0
        %341 = vmatpush1.msra.mxu0 %v285
        %342 = vmatprep.subr.mxu0 0.0
        %343 = vmatpush1.msra.mxu0 %v286
        %344 = vmatprep.subr.mxu0 0.0
        %345 = vmatpush1.msra.mxu0 %v287
        %346 = vmatprep.subr.mxu0 0.0
        %347 = vmatpush1.msra.mxu0 %v288
        %348 = vmatprep.subr.mxu0 0.0
        %349 = vmatpush1.msra.mxu0 %v289
        %350 = vmatprep.subr.mxu0 0.0
        %351 = vmatpush1.msra.mxu0 %v290
        %352 = vmatprep.subr.mxu0 0.0
        %353 = vmatpush1.msra.mxu0 %v291
        %354 = vmatprep.subr.mxu0 0.0
        %355 = vmatpush1.msra.mxu0 %v292
        %356 = vmatprep.subr.mxu0 0.0
        %357 = vmatpush1.msra.mxu0 %v293
        %358 = vmatprep.mubr.f32.mxu0 %v260
        %359 = vmatmul.mubr.f32.gmra.mrb[0].mxu0 %v258
        %v360 = vpop.f32.mrb[0].mxu0
        %v361 = vadd.f32 0.0, %v360
        %v362 = vpop.f32.mrb[0].mxu0
        %363 = vdwg.mxu0
        %vm364 = vcmask 203776
        %365 = vst.msk [vmem:[%s163] sm:$0xff] %vm364, %v361
        %s366 = sand.u32 %s93, 1
        %s367 = scalar_lea.sflag [#allocation3], %s366
        %s368 = sand.u32 %s93, 1
        %s369 = smul.addr %s368, 8
        %s370 = scalar_lea.vmem [#allocation2], %s369
        // Predicated region
        $region33: #{tpu_custom_call.1} parent=31 // pred_check
          %p371 = pneg %p103
        $region34: #{tpu_custom_call.1} parent=31 // pred_check_branch
          %373 = sbr.rel (%p371) target = $region36
        $region35: #{tpu_custom_call.1} parent=31 // pred_region
          %s375 = ssub.s32 128, 128
          %376 = vsyncadd %s367, %s375
          %s377 = smul.addr %s17, 128
          %s378 = scalar_lea.hbm %s3, %s377
          %s380 = sshll.u32 %s370, 4
          %s381 = int_to_ptr.vmem [resolvable:$true] %s380
          %383 = dma.vmem_to_hbm [thread:$0]  %s381, 128, %s378, %s367
        $region36: #{tpu_custom_call.1} parent=31 // pred_fallthru
          _
      $region32: #{tpu_custom_call.1} parent=5 // pred_fallthru
        _
      %p384 = scmp.le.s32.totalorder 2, %s12
      // Predicated region
      $region37: #{tpu_custom_call.1} parent=5 // pred_check
        %p385 = pneg %p384
      $region38: #{tpu_custom_call.1} parent=5 // pred_check_branch
        %387 = sbr.rel (%p385) target = $region40
      $region39: #{tpu_custom_call.1} parent=5 // pred_region
        %s388 = ssub.s32 %s12, 2
        // Predicated region
        $region41: #{tpu_custom_call.1} parent=39 // pred_check
          %p389 = pneg %p109
        $region42: #{tpu_custom_call.1} parent=39 // pred_check_branch
          %391 = sbr.rel (%p389) target = $region44
        $region43: #{tpu_custom_call.1} parent=39 // pred_region
          %s392 = sand.u32 %s94, 1
          %s393 = scalar_lea.sflag [#allocation3], %s392
          %s394 = sand.u32 %s94, 1
          %s395 = smul.addr %s394, 8
          %s396 = scalar_lea.vmem [#allocation2], %s395
          %397 = dma.done %s393, 128
        $region44: #{tpu_custom_call.1} parent=39 // pred_fallthru
          _
      $region40: #{tpu_custom_call.1} parent=5 // pred_fallthru
        _
    $region6: #{tpu_custom_call.1} parent=1 // loop_footer
      %s16 = sadd.s32 1, %s12
    $region7: #{tpu_custom_call.1} parent=1 // loop_footer_branch
      %11 = sbr.rel target = $region3
    $region8: #{tpu_custom_call.1} parent=1 // loop_exit
      _
    %398 = vsyncpa [#allocation3], 1
    %s399 = scalar_lea.sflag [#allocation3], 1
    %400 = vsyncpa %s399, 1

// kernel: tpu_custom_call.1
$region0: #{tpu_custom_call.1}
  #allocation0 [shape = 'u32[]', space=smem, size = 0x4, offset = 0x4, fixed_abs, tag = 'smem constant byte address 0x4 - core index']
  #allocation1 [shape = 'u32[144,128]{1,0:T(1,128)}', space=vmem, size = 0x12000, scoped, tag = 'internal scratch']
  %s0 = inlined_call_operand.vmem [shape: f32[2,37,256], index: 0, kind: input, shape index: {}]
  %s1 = inlined_call_operand.vmem [shape: f32[8,37], index: 1, kind: input, shape index: {}]
  %s2 = inlined_call_operand.vmem [shape: f32[256,25], index: 2, kind: input, shape index: {}]
  %s3 = inlined_call_operand.hbm [shape: f32[2,8,25], index: 3, kind: output, shape index: {}]
  %s4 = sld [smem:[#allocation0]]
  $region45: #{tpu_custom_call.1} parent=0
    _
  %s6 = ssub.s32 1, %s4
  %s7 = scalar_select 0, %s6, %s4
  $region1: #{tpu_custom_call.1} parent=0
    #allocation2 [shape = 'u8[8192]{0}', space=vmem, size = 0x2000, scoped, tag = 'output window, operand 0']
    #allocation3 [shape = 's32[2]{0}', space=sflag, size = 0x8, scoped, tag = 'scoped memory for tpu_custom_call.1']
    %8 = vsyncpa [#allocation3], 0
    %s9 = scalar_lea.sflag [#allocation3], 1
    %10 = vsyncpa %s9, 0
    loop: start=0, step=1, limit=4
    $region2: #{tpu_custom_call.1} parent=1 // loop_pre_header
      _
    $region3: #{tpu_custom_call.1} parent=1 // loop_header
      %s12 = sphi 0, %s16
      %p13 = scmp.ge.s32.totalorder %s12, 4
      %s22 = sphi 0, %s24
      %s25 = sphi 0, %s22
      %s26 = sphi 0, %s25
      %s42 = sphi 0, %s26
      %s46 = sphi 0, %s46
      %s48 = sphi 0, %s46
      %s49 = sphi 0, %s48
      %s63 = sphi 0, %s49
      %s67 = sphi 0, %s67
      %s69 = sphi 0, %s67
      %s70 = sphi 0, %s69
      %s84 = sphi 0, %s70
      %s90 = sphi 0, %s92
      %s93 = sphi 0, %s90
      %s94 = sphi 0, %s93
      %s110 = sphi 0, %s94
    $region4: #{tpu_custom_call.1} parent=1 // loop_header_branch
      %15 = sbr.rel (%p13) target = $region8
    $region5: #{tpu_custom_call.1} parent=1 // loop_body
      %s17 = ssub.s32 %s12, 1
      %s18 = ssub.s32 %s12, 2
      %s19 = sadd.s32 %s12, 1
      %s20 = ssub.s32 %s12, %s19
      %p21 = scmp.eq.s32.totalorder %s20, 0
      %s23 = sadd.s32 %s22, 1
      %s24 = scalar_select %p21, %s22, %s23
      %p27 = pneg %p21
      %p28 = scmp.eq.s32.totalorder %s12, 1
      %p29 = por %p27, %p28
      %p30 = scmp.ne.s32.totalorder %s22, %s25
      %p31 = scmp.eq.s32.totalorder %s12, 0
      %p32 = por %p30, %p31
      %p33 = scmp.ne.s32.totalorder %s22, %s25
      %p34 = scmp.eq.s32.totalorder %s17, 1
      %p35 = por %p33, %p34
      %p36 = scmp.ne.s32.totalorder %s25, %s26
      %p37 = scmp.eq.s32.totalorder %s17, 0
      %p38 = por %p36, %p37
      %p39 = scmp.ne.s32.totalorder %s25, %s26
      %p40 = scmp.eq.s32.totalorder %s18, 1
      %p41 = por %p39, %p40
      %p43 = scmp.ne.s32.totalorder %s26, %s42
      %p44 = scmp.eq.s32.totalorder %s18, 0
      %p45 = por %p43, %p44
      %s47 = sadd.s32 %s46, 1
      %p50 = scmp.eq.s32.totalorder %s12, 1
      %p51 = scmp.ne.s32.totalorder %s46, %s48
      %p52 = scmp.eq.s32.totalorder %s12, 0
      %p53 = por %p51, %p52
      %p54 = scmp.ne.s32.totalorder %s46, %s48
      %p55 = scmp.eq.s32.totalorder %s17, 1
      %p56 = por %p54, %p55
      %p57 = scmp.ne.s32.totalorder %s48, %s49
      %p58 = scmp.eq.s32.totalorder %s17, 0
      %p59 = por %p57, %p58
      %p60 = scmp.ne.s32.totalorder %s48, %s49
      %p61 = scmp.eq.s32.totalorder %s18, 1
      %p62 = por %p60, %p61
      %p64 = scmp.ne.s32.totalorder %s49, %s63
      %p65 = scmp.eq.s32.totalorder %s18, 0
      %p66 = por %p64, %p65
      %s68 = sadd.s32 %s67, 1
      %p71 = scmp.eq.s32.totalorder %s12, 1
      %p72 = scmp.ne.s32.totalorder %s67, %s69
      %p73 = scmp.eq.s32.totalorder %s12, 0
      %p74 = por %p72, %p73
      %p75 = scmp.ne.s32.totalorder %s67, %s69
      %p76 = scmp.eq.s32.totalorder %s17, 1
      %p77 = por %p75, %p76
      %p78 = scmp.ne.s32.totalorder %s69, %s70
      %p79 = scmp.eq.s32.totalorder %s17, 0
      %p80 = por %p78, %p79
      %p81 = scmp.ne.s32.totalorder %s69, %s70
      %p82 = scmp.eq.s32.totalorder %s18, 1
      %p83 = por %p81, %p82
      %p85 = scmp.ne.s32.totalorder %s70, %s84
      %p86 = scmp.eq.s32.totalorder %s18, 0
      %p87 = por %p85, %p86
      %s88 = ssub.s32 %s12, %s19
      %p89 = scmp.eq.s32.totalorder %s88, 0
      %s91 = sadd.s32 %s90, 1
      %s92 = scalar_select %p89, %s90, %s91
      %p95 = pneg %p89
      %p96 = scmp.eq.s32.totalorder %s12, 1
      %p97 = por %p95, %p96
      %p98 = scmp.ne.s32.totalorder %s90, %s93
      %p99 = scmp.eq.s32.totalorder %s12, 0
      %p100 = por %p98, %p99
      %p101 = scmp.ne.s32.totalorder %s90, %s93
      %p102 = scmp.eq.s32.totalorder %s17, 1
      %p103 = por %p101, %p102
      %p104 = scmp.ne.s32.totalorder %s93, %s94
      %p105 = scmp.eq.s32.totalorder %s17, 0
      %p106 = por %p104, %p105
      %p107 = scmp.ne.s32.totalorder %s93, %s94
      %p108 = scmp.eq.s32.totalorder %s18, 1
      %p109 = por %p107, %p108
      %p111 = scmp.ne.s32.totalorder %s94, %s110
      %p112 = scmp.eq.s32.totalorder %s18, 0
      %p113 = por %p111, %p112
      %p114 = scmp.le.s32.totalorder 1, %s12
      %p115 = scmp.lt.s32.totalorder %s12, 3
      %p116 = pnand %p114, %p115
      %p117 = pneg %p116
      // Predicated region
      $region9: #{tpu_custom_call.1} parent=5 // pred_check
        _
      $region10: #{tpu_custom_call.1} parent=5 // pred_check_branch
        %119 = sbr.rel (%p116) target = $region12
      $region11: #{tpu_custom_call.1} parent=5 // pred_region
        %s120 = ssub.s32 %s12, 1
        // Predicated region
        $region13: #{tpu_custom_call.1} parent=11 // pred_check
          %p121 = pneg %p59
        $region14: #{tpu_custom_call.1} parent=11 // pred_check_branch
          %123 = sbr.rel (%p121) target = $region16
        $region15: #{tpu_custom_call.1} parent=11 // pred_region
          _
        $region16: #{tpu_custom_call.1} parent=11 // pred_fallthru
          _
        // Predicated region
        $region17: #{tpu_custom_call.1} parent=11 // pred_check
          %p124 = pneg %p80
        $region18: #{tpu_custom_call.1} parent=11 // pred_check_branch
          %126 = sbr.rel (%p124) target = $region20
        $region19: #{tpu_custom_call.1} parent=11 // pred_region
          _
        $region20: #{tpu_custom_call.1} parent=11 // pred_fallthru
          _
      $region12: #{tpu_custom_call.1} parent=5 // pred_fallthru
        _
      %p127 = scmp.lt.s32.totalorder %s12, 2
      // Predicated region
      $region21: #{tpu_custom_call.1} parent=5 // pred_check
        %p128 = pneg %p127
      $region22: #{tpu_custom_call.1} parent=5 // pred_check_branch
        %130 = sbr.rel (%p128) target = $region24
      $region23: #{tpu_custom_call.1} parent=5 // pred_region
        // Predicated region
        $region25: #{tpu_custom_call.1} parent=23 // pred_check
          %p131 = pneg %p32
        $region26: #{tpu_custom_call.1} parent=23 // pred_check_branch
          %133 = sbr.rel (%p131) target = $region28
        $region27: #{tpu_custom_call.1} parent=23 // pred_region
          %p134 = scmp.lt.s32.totalorder %s12, 1
          %s135 = scalar_select %p134, %s12, 1
          %s136 = smul.addr %s135, 10
          %s137 = smul.addr %s136, 8
          %s138 = scalar_lea.vmem %s0, %s137
        $region28: #{tpu_custom_call.1} parent=23 // pred_fallthru
          _
      $region24: #{tpu_custom_call.1} parent=5 // pred_fallthru
        _
      %p139 = scmp.le.s32.totalorder 1, %s12
      %p140 = scmp.lt.s32.totalorder %s12, 3
      %p141 = pnand %p139, %p140
      %p142 = pneg %p141
      // Predicated region
      $region29: #{tpu_custom_call.1} parent=5 // pred_check
        _
      $region30: #{tpu_custom_call.1} parent=5 // pred_check_branch
        %144 = sbr.rel (%p141) target = $region32
      $region31: #{tpu_custom_call.1} parent=5 // pred_region
        %s145 = ssub.s32 %s12, 1
        %p146 = scmp.lt.s32.totalorder %s17, 1
        %s147 = scalar_select %p146, %s17, 1
        %s148 = smul.addr %s147, 10
        %s149 = smul.addr %s148, 8
        %s150 = scalar_lea.vmem %s0, %s149
        %p151 = pneg %p38
        %p152 = pneg %p35
        %p153 = pneg %p59
        %p154 = pneg %p56
        %p155 = pneg %p80
        %p156 = pneg %p77
        %p157 = pneg %p106
        %p158 = pneg %p103
        %s159 = sand.u32 %s93, 1
        %s160 = scalar_lea.sflag [#allocation3], %s159
        %s161 = sand.u32 %s93, 1
        %s162 = smul.addr %s161, 8
        %s163 = scalar_lea.vmem [#allocation2], %s162
        %p164 = scmp.lt.s32.totalorder %s17, 1
        %s165 = scalar_select %p164, %s17, 1
        %s166 = smul.addr %s165, 10
        %s167 = smul.addr %s166, 8
        %s168 = scalar_lea.vmem %s0, %s167
        %v169 = vld [vmem:[%s1] sm:$0xff]
        %v170 = vld [vmem:[%s168] sm:$0xff]
        %v171 = vld [vmem:[%s168 + $0x8] sm:$0xff]
        %v172 = vld [vmem:[%s168 + $0x10] sm:$0xff]
        %v173 = vld [vmem:[%s168 + $0x18] sm:$0xff]
        %v174 = vld [vmem:[%s168 + $0x20] sm:$0xff]
        %v175 = vld [vmem:[%s168 + $0x28] sm:$0xff]
        %v176 = vld [vmem:[%s168 + $0x30] sm:$0xff]
        %v177 = vld [vmem:[%s168 + $0x38] sm:$0xff]
        %v178 = vld [vmem:[%s168 + $0x40] sm:$0x1f]
        %v179 = vld [vmem:[%s168 + $0x48] sm:$0x1f]
        %vm180 = vcmask 302080
        %v182 = vsel %vm180, %v169, 0
        %vm184 = vcmask 1044480
        %v186 = vsel %vm184, %v178, 0
        %v189 = vsel %vm184, %v179, 0
        %191 = vmatprep.subr.mxu0 %v171
        %192 = vmatpush1.msra.mxu0 %v170
        %193 = vmatprep.subr.mxu0 %v173
        %194 = vmatpush1.msra.mxu0 %v172
        %195 = vmatprep.subr.mxu0 %v175
        %196 = vmatpush1.msra.mxu0 %v174
        %197 = vmatprep.subr.mxu0 %v177
        %198 = vmatpush1.msra.mxu0 %v176
        %199 = vmatprep.subr.mxu0 %v189
        %200 = vmatpush1.msra.mxu0 %v186
        %201 = vmatprep.subr.mxu0 0.0
        %202 = vmatpush1.msra.mxu0 0.0
        %203 = vmatprep.subr.mxu0 0.0
        %204 = vmatpush1.msra.mxu0 0.0
        %205 = vmatprep.subr.mxu0 0.0
        %206 = vmatpush1.msra.mxu0 0.0
        %207 = vmatprep.subr.mxu0 0.0
        %208 = vmatpush1.msra.mxu0 0.0
        %209 = vmatprep.subr.mxu0 0.0
        %210 = vmatpush1.msra.mxu0 0.0
        %211 = vmatprep.subr.mxu0 0.0
        %212 = vmatpush1.msra.mxu0 0.0
        %213 = vmatprep.subr.mxu0 0.0
        %214 = vmatpush1.msra.mxu0 0.0
        %215 = vmatprep.subr.mxu0 0.0
        %216 = vmatpush1.msra.mxu0 0.0
        %217 = vmatprep.subr.mxu0 0.0
        %218 = vmatpush1.msra.mxu0 0.0
        %219 = vmatprep.subr.mxu0 0.0
        %220 = vmatpush1.msra.mxu0 0.0
        %221 = vmatprep.subr.mxu0 0.0
        %222 = vmatpush1.msra.mxu0 0.0
        %223 = vmatprep.subr.mxu0 0.0
        %224 = vmatpush1.msra.mxu0 0.0
        %225 = vmatprep.subr.mxu0 0.0
        %226 = vmatpush1.msra.mxu0 0.0
        %227 = vmatprep.subr.mxu0 0.0
        %228 = vmatpush1.msra.mxu0 0.0
        %229 = vmatprep.subr.mxu0 0.0
        %230 = vmatpush1.msra.mxu0 0.0
        %231 = vmatprep.subr.mxu0 0.0
        %232 = vmatpush1.msra.mxu0 0.0
        %233 = vmatprep.subr.mxu0 0.0
        %234 = vmatpush1.msra.mxu0 0.0
        %235 = vmatprep.subr.mxu0 0.0
        %236 = vmatpush1.msra.mxu0 0.0
        %237 = vmatprep.subr.mxu0 0.0
        %238 = vmatpush1.msra.mxu0 0.0
        %239 = vmatprep.subr.mxu0 0.0
        %240 = vmatpush1.msra.mxu0 0.0
        %241 = vmatprep.subr.mxu0 0.0
        %242 = vmatpush1.msra.mxu0 0.0
        %243 = vmatprep.subr.mxu0 0.0
        %244 = vmatpush1.msra.mxu0 0.0
        %245 = vmatprep.subr.mxu0 0.0
        %246 = vmatpush1.msra.mxu0 0.0
        %247 = vmatprep.subr.mxu0 0.0
        %248 = vmatpush1.msra.mxu0 0.0
        %249 = vmatprep.subr.mxu0 0.0
        %250 = vmatpush1.msra.mxu0 0.0
        %251 = vmatprep.subr.mxu0 0.0
        %252 = vmatpush1.msra.mxu0 0.0
        %253 = vmatprep.subr.mxu0 0.0
        %254 = vmatpush1.msra.mxu0 0.0
        %255 = vmatprep.mubr.f32.mxu0 0.0
        %256 = vmatmul.mubr.f32.gmra.mrb[0].mxu0 %v182
        %v257 = vpop.f32.mrb[0].mxu0
        %v258 = vadd.f32 0.0, %v257
        %v259 = vpop.f32.mrb[0].mxu0
        %v260 = vadd.f32 0.0, %v259
        %261 = vdwg.mxu0
        %v262 = vld [vmem:[%s2] sm:$0xff]
        %v263 = vld [vmem:[%s2 + $0x8] sm:$0xff]
        %v264 = vld [vmem:[%s2 + $0x10] sm:$0xff]
        %v265 = vld [vmem:[%s2 + $0x18] sm:$0xff]
        %v266 = vld [vmem:[%s2 + $0x20] sm:$0xff]
        %v267 = vld [vmem:[%s2 + $0x28] sm:$0xff]
        %v268 = vld [vmem:[%s2 + $0x30] sm:$0xff]
        %v269 = vld [vmem:[%s2 + $0x38] sm:$0xff]
        %v270 = vld [vmem:[%s2 + $0x40] sm:$0xff]
        %v271 = vld [vmem:[%s2 + $0x48] sm:$0xff]
        %v272 = vld [vmem:[%s2 + $0x50] sm:$0xff]
        %v273 = vld [vmem:[%s2 + $0x58] sm:$0xff]
        %v274 = vld [vmem:[%s2 + $0x60] sm:$0xff]
        %v275 = vld [vmem:[%s2 + $0x68] sm:$0xff]
        %v276 = vld [vmem:[%s2 + $0x70] sm:$0xff]
        %v277 = vld [vmem:[%s2 + $0x78] sm:$0xff]
        %v278 = vld [vmem:[%s2 + $0x80] sm:$0xff]
        %v279 = vld [vmem:[%s2 + $0x88] sm:$0xff]
        %v280 = vld [vmem:[%s2 + $0x90] sm:$0xff]
        %v281 = vld [vmem:[%s2 + $0x98] sm:$0xff]
        %v282 = vld [vmem:[%s2 + $0xa0] sm:$0xff]
        %v283 = vld [vmem:[%s2 + $0xa8] sm:$0xff]
        %v284 = vld [vmem:[%s2 + $0xb0] sm:$0xff]
        %v285 = vld [vmem:[%s2 + $0xb8] sm:$0xff]
        %v286 = vld [vmem:[%s2 + $0xc0] sm:$0xff]
        %v287 = vld [vmem:[%s2 + $0xc8] sm:$0xff]
        %v288 = vld [vmem:[%s2 + $0xd0] sm:$0xff]
        %v289 = vld [vmem:[%s2 + $0xd8] sm:$0xff]
        %v290 = vld [vmem:[%s2 + $0xe0] sm:$0xff]
        %v291 = vld [vmem:[%s2 + $0xe8] sm:$0xff]
        %v292 = vld [vmem:[%s2 + $0xf0] sm:$0xff]
        %v293 = vld [vmem:[%s2 + $0xf8] sm:$0xff]
        %294 = vmatprep.subr.mxu0 0.0
        %295 = vmatpush1.msra.mxu0 %v262
        %296 = vmatprep.subr.mxu0 0.0
        %297 = vmatpush1.msra.mxu0 %v263
        %298 = vmatprep.subr.mxu0 0.0
        %299 = vmatpush1.msra.mxu0 %v264
        %300 = vmatprep.subr.mxu0 0.0
        %301 = vmatpush1.msra.mxu0 %v265
        %302 = vmatprep.subr.mxu0 0.0
        %303 = vmatpush1.msra.mxu0 %v266
        %304 = vmatprep.subr.mxu0 0.0
        %305 = vmatpush1.msra.mxu0 %v267
        %306 = vmatprep.subr.mxu0 0.0
        %307 = vmatpush1.msra.mxu0 %v268
        %308 = vmatprep.subr.mxu0 0.0
        %309 = vmatpush1.msra.mxu0 %v269
        %310 = vmatprep.subr.mxu0 0.0
        %311 = vmatpush1.msra.mxu0 %v270
        %312 = vmatprep.subr.mxu0 0.0
        %313 = vmatpush1.msra.mxu0 %v271
        %314 = vmatprep.subr.mxu0 0.0
        %315 = vmatpush1.msra.mxu0 %v272
        %316 = vmatprep.subr.mxu0 0.0
        %317 = vmatpush1.msra.mxu0 %v273
        %318 = vmatprep.subr.mxu0 0.0
        %319 = vmatpush1.msra.mxu0 %v274
        %320 = vmatprep.subr.mxu0 0.0
        %321 = vmatpush1.msra.mxu0 %v275
        %322 = vmatprep.subr.mxu0 0.0
        %323 = vmatpush1.msra.mxu0 %v276
        %324 = vmatprep.subr.mxu0 0.0
        %325 = vmatpush1.msra.mxu0 %v277
        %326 = vmatprep.subr.mxu0 0.0
        %327 = vmatpush1.msra.mxu0 %v278
        %328 = vmatprep.subr.mxu0 0.0
        %329 = vmatpush1.msra.mxu0 %v279
        %330 = vmatprep.subr.mxu0 0.0
        %331 = vmatpush1.msra.mxu0 %v280
        %332 = vmatprep.subr.mxu0 0.0
        %333 = vmatpush1.msra.mxu0 %v281
        %334 = vmatprep.subr.mxu0 0.0
        %335 = vmatpush1.msra.mxu0 %v282
        %336 = vmatprep.subr.mxu0 0.0
        %337 = vmatpush1.msra.mxu0 %v283
        %338 = vmatprep.subr.mxu0 0.0
        %339 = vmatpush1.msra.mxu0 %v284
        %340 = vmatprep.subr.mxu0 0.0
        %341 = vmatpush1.msra.mxu0 %v285
        %342 = vmatprep.subr.mxu0 0.0
        %343 = vmatpush1.msra.mxu0 %v286
        %344 = vmatprep.subr.mxu0 0.0
        %345 = vmatpush1.msra.mxu0 %v287
        %346 = vmatprep.subr.mxu0 0.0
        %347 = vmatpush1.msra.mxu0 %v288
        %348 = vmatprep.subr.mxu0 0.0
        %349 = vmatpush1.msra.mxu0 %v289
        %350 = vmatprep.subr.mxu0 0.0
        %351 = vmatpush1.msra.mxu0 %v290
        %352 = vmatprep.subr.mxu0 0.0
        %353 = vmatpush1.msra.mxu0 %v291
        %354 = vmatprep.subr.mxu0 0.0
        %355 = vmatpush1.msra.mxu0 %v292
        %356 = vmatprep.subr.mxu0 0.0
        %357 = vmatpush1.msra.mxu0 %v293
        %358 = vmatprep.mubr.f32.mxu0 %v260
        %359 = vmatmul.mubr.f32.gmra.mrb[0].mxu0 %v258
        %v360 = vpop.f32.mrb[0].mxu0
        %v361 = vadd.f32 0.0, %v360
        %v362 = vpop.f32.mrb[0].mxu0
        %363 = vdwg.mxu0
        %vm364 = vcmask 203776
        %365 = vst.msk [vmem:[%s163] sm:$0xff] %vm364, %v361
        %s366 = sand.u32 %s93, 1
        %s367 = scalar_lea.sflag [#allocation3], %s366
        %s368 = sand.u32 %s93, 1
        %s369 = smul.addr %s368, 8
        %s370 = scalar_lea.vmem [#allocation2], %s369
        // Predicated region
        $region33: #{tpu_custom_call.1} parent=31 // pred_check
          %p371 = pneg %p103
        $region34: #{tpu_custom_call.1} parent=31 // pred_check_branch
          %373 = sbr.rel (%p371) target = $region36
        $region35: #{tpu_custom_call.1} parent=31 // pred_region
          %s375 = ssub.s32 128, 128
          %376 = vsyncadd %s367, %s375
          %s377 = smul.addr %s17, 128
          %s378 = scalar_lea.hbm %s3, %s377
          %s380 = sshll.u32 %s370, 4
          %s381 = int_to_ptr.vmem [resolvable:$true] %s380
          %383 = dma.vmem_to_hbm [thread:$0]  %s381, 128, %s378, %s367
        $region36: #{tpu_custom_call.1} parent=31 // pred_fallthru
          _
      $region32: #{tpu_custom_call.1} parent=5 // pred_fallthru
        _
      %p384 = scmp.le.s32.totalorder 2, %s12
      // Predicated region
      $region37: #{tpu_custom_call.1} parent=5 // pred_check
        %p385 = pneg %p384
      $region38: #{tpu_custom_call.1} parent=5 // pred_check_branch
        %387 = sbr.rel (%p385) target = $region40
      $region39: #{tpu_custom_call.1} parent=5 // pred_region
        %s388 = ssub.s32 %s12, 2
        // Predicated region
        $region41: #{tpu_custom_call.1} parent=39 // pred_check
          %p389 = pneg %p109
        $region42: #{tpu_custom_call.1} parent=39 // pred_check_branch
          %391 = sbr.rel (%p389) target = $region44
        $region43: #{tpu_custom_call.1} parent=39 // pred_region
          %s392 = sand.u32 %s94, 1
          %s393 = scalar_lea.sflag [#allocation3], %s392
          %s394 = sand.u32 %s94, 1
          %s395 = smul.addr %s394, 8
          %s396 = scalar_lea.vmem [#allocation2], %s395
          %397 = dma.done %s393, 128
        $region44: #{tpu_custom_call.1} parent=39 // pred_fallthru
          _
      $region40: #{tpu_custom_call.1} parent=5 // pred_fallthru
        _
    $region6: #{tpu_custom_call.1} parent=1 // loop_footer
      %s16 = sadd.s32 1, %s12
    $region7: #{tpu_custom_call.1} parent=1 // loop_footer_branch
      %11 = sbr.rel target = $region3
    $region8: #{tpu_custom_call.1} parent=1 // loop_exit
      _
    %398 = vsyncpa [#allocation3], 1
    %s399 = scalar_lea.sflag [#allocation3], 1
    %400 = vsyncpa %s399, 1

</llo_original>
